<compile_context>
chip_gen: v5e
topology: v5e:2x2
jax: 0.10.0
libtpu: 0.0.40
codegen_flags: <defaults>
</compile_context>

<pallas_src>
import math

import jax
import jax.numpy as jnp
from jax.experimental import pallas as pl
from jax.experimental.pallas import tpu as pltpu


def _round_up(n, m):
    return ((n + m - 1) // m) * m


def _mlp_kernel(x_ref, *rest):
    """Whole MLP chain for one batch tile: (x @ W0 + b0) -> tanh -> ... -> last Linear."""
    o_ref = rest[-1]
    wb = rest[:-1]                      # alternating (w_ref, b_ref) per Linear layer
    n_lin = len(wb) // 2

    h = x_ref[...]
    for i in range(n_lin):
        w = wb[2 * i][...]              # (d_in_i, d_out_i)
        b = wb[2 * i + 1][...]          # (1, d_out_i)
        h = jnp.dot(h, w, preferred_element_type=jnp.float32) + b
        if i < n_lin - 1:               # nn.Tanh() after every hidden Linear (EUP)
            h = jnp.tanh(h)
    o_ref[...] = h.astype(o_ref.dtype)


def deep_model_single(x, weights, biases, f_mean, f_std, is_norm=True, tile_n=None):
    """weights[i]: (planes[i], planes[i+1]) (already (in, out)); biases[i]: (planes[i+1],)."""
    N, d_in = x.shape
    d_out = weights[-1].shape[1]

    weights = [w.astype(jnp.float32) for w in weights]
    biases = [b.astype(jnp.float32) for b in biases]

    # Fold f_norm.back (affine de-normalization) into the final Linear layer.
    if is_norm:
        fs = f_std.reshape(1, d_out).astype(jnp.float32)
        fm = f_mean.reshape(d_out).astype(jnp.float32)
        weights[-1] = weights[-1] * fs
        biases[-1] = biases[-1] * fs.reshape(d_out) + fm

    # Tile the batch axis; pad N up so the block shape satisfies the (8, 128) rule.
    if tile_n is None:
        tile_n = min(256, _round_up(N, 8))
    n_pad = _round_up(N, tile_n)
    if n_pad != N:
        x = jnp.pad(x, ((0, n_pad - N), (0, 0)))
    grid = (n_pad // tile_n,)

    in_specs = [pl.BlockSpec((tile_n, d_in), lambda i: (i, 0))]      # x tile (rows)
    args = [x.astype(jnp.float32)]
    for w, b in zip(weights, biases):
        din_i, dout_i = w.shape
        in_specs.append(pl.BlockSpec((din_i, dout_i), lambda i: (0, 0)))   # full weight
        in_specs.append(pl.BlockSpec((1, dout_i), lambda i: (0, 0)))       # bias row
        args += [w, b.reshape(1, dout_i)]

    out = pl.pallas_call(
        _mlp_kernel,
        out_shape=jax.ShapeDtypeStruct((n_pad, d_out), jnp.float32),
        grid_spec=pltpu.PrefetchScalarGridSpec(
            num_scalar_prefetch=0,
            grid=grid,
            in_specs=in_specs,
            out_specs=pl.BlockSpec((tile_n, d_out), lambda i: (i, 0)),  # lane-dense store
        ),
        compiler_params=pltpu.CompilerParams(dimension_semantics=("parallel",)),
    )(*args)
    return out[:N]


def init_params(planes, key):
    """Xavier-normal weights (gain=1, matching torch.nn.init.xavier_normal_), zero biases."""
    n_lin = len(planes) - 1
    keys = jax.random.split(key, n_lin)
    weights, biases = [], []
    for li in range(n_lin):
        fan_in, fan_out = planes[li], planes[li + 1]
        std = math.sqrt(2.0 / (fan_in + fan_out))
        w_torch = std * jax.random.normal(keys[li], (fan_out, fan_in), jnp.float32)
        weights.append(w_torch.T)                       # (in, out) so that x @ W
        biases.append(jnp.zeros((fan_out,), jnp.float32))
    return weights, biases


def reference(x, weights, biases, f_mean, f_std, is_norm=True):
    """Pure-JAX reference matching the PyTorch forward (Tanh activation)."""
    h = x
    for i in range(len(weights)):
        h = h @ weights[i] + biases[i]
        if i < len(weights) - 1:
            h = jnp.tanh(h)
    if is_norm:
        h = h * f_std + f_mean
    return h


if __name__ == "__main__":
    planes = [4, 32, 32, 3]     # d_in=4, two hidden Tanh layers of 32, d_out=3
    N = 8

    key = jax.random.PRNGKey(0)
    k_x, k_w, k_fm, k_fs = jax.random.split(key, 4)

    x = jax.random.normal(k_x, (N, planes[0]), jnp.float32)
    f_mean = 0.5 * jax.random.normal(k_fm, (planes[-1],), jnp.float32)
    f_std = 1.0 + 0.1 * jnp.abs(jax.random.normal(k_fs, (planes[-1],), jnp.float32))

    weights, biases = init_params(planes, k_w)

    out = deep_model_single(x, weights, biases, f_mean, f_std, is_norm=True)
    out = jax.block_until_ready(out)
    ref = reference(x, weights, biases, f_mean, f_std, is_norm=True)
    assert out.shape == (N, planes[-1]), out.shape
    assert jnp.allclose(out, ref, atol=1e-4, rtol=1e-4), (out, ref)

    # Un-normalized branch (is_norm=False skips f_norm.back, as in the torch forward).
    out_raw = jax.block_until_ready(
        deep_model_single(x, weights, biases, f_mean, f_std, is_norm=False))
    ref_raw = reference(x, weights, biases, f_mean, f_std, is_norm=False)
    assert jnp.allclose(out_raw, ref_raw, atol=1e-4, rtol=1e-4), (out_raw, ref_raw)

    print("KERNEL_OK")
</pallas_src>

<mosaic_0001>
module attributes {stable_mosaic.version = 11 : i64} {
  func.func @_mlp_kernel(%arg0: i32, %arg1: memref<8x4xf32, #tpu.memory_space<vmem>>, %arg2: memref<4x32xf32, #tpu.memory_space<vmem>>, %arg3: memref<1x32xf32, #tpu.memory_space<vmem>>, %arg4: memref<32x32xf32, #tpu.memory_space<vmem>>, %arg5: memref<1x32xf32, #tpu.memory_space<vmem>>, %arg6: memref<32x3xf32, #tpu.memory_space<vmem>>, %arg7: memref<1x3xf32, #tpu.memory_space<vmem>>, %arg8: memref<8x3xf32, #tpu.memory_space<vmem>>) attributes {dimension_semantics = [#tpu.dimension_semantics<parallel>], iteration_bounds = array<i64: 1>, scalar_prefetch = 0 : i64, scratch_operands = 0 : i64, tpu.core_type = #tpu.core_type<tc>, window_params = [{transform_indices = @transform_0, window_bounds = array<i64: 8, 4>}, {pipeline_mode = #tpu.pipeline_mode<synchronous>, transform_indices = @transform_1, window_bounds = array<i64: 4, 32>}, {pipeline_mode = #tpu.pipeline_mode<synchronous>, transform_indices = @transform_2, window_bounds = array<i64: 1, 32>}, {pipeline_mode = #tpu.pipeline_mode<synchronous>, transform_indices = @transform_3, window_bounds = array<i64: 32, 32>}, {pipeline_mode = #tpu.pipeline_mode<synchronous>, transform_indices = @transform_4, window_bounds = array<i64: 1, 32>}, {pipeline_mode = #tpu.pipeline_mode<synchronous>, transform_indices = @transform_5, window_bounds = array<i64: 32, 3>}, {pipeline_mode = #tpu.pipeline_mode<synchronous>, transform_indices = @transform_6, window_bounds = array<i64: 1, 3>}, {transform_indices = @transform_7, window_bounds = array<i64: 8, 3>}]} {
    %c0 = arith.constant 0 : index
    %c0_0 = arith.constant 0 : index
    %0 = vector.load %arg1[%c0, %c0_0] : memref<8x4xf32, #tpu.memory_space<vmem>>, vector<8x4xf32>
    %c0_1 = arith.constant 0 : index
    %c0_2 = arith.constant 0 : index
    %1 = vector.load %arg2[%c0_1, %c0_2] : memref<4x32xf32, #tpu.memory_space<vmem>>, vector<4x32xf32>
    %c0_3 = arith.constant 0 : index
    %c0_4 = arith.constant 0 : index
    %2 = vector.load %arg3[%c0_3, %c0_4] : memref<1x32xf32, #tpu.memory_space<vmem>>, vector<1x32xf32>
    %cst = arith.constant dense<0.000000e+00> : vector<8x32xf32>
    %3 = tpu.matmul %0, %1, %cst {dimension_numbers = #tpu.dot_dimension_numbers<[1], [0], [0], [1], [0, 0, 1, 1], [], []>} : vector<8x4xf32>, vector<4x32xf32>, vector<8x32xf32> -> vector<8x32xf32>
    %4 = vector.broadcast %2 : vector<1x32xf32> to vector<8x32xf32>
    %5 = arith.addf %3, %4 : vector<8x32xf32>
    %6 = math.tanh %5 : vector<8x32xf32>
    %c0_5 = arith.constant 0 : index
    %c0_6 = arith.constant 0 : index
    %7 = vector.load %arg4[%c0_5, %c0_6] : memref<32x32xf32, #tpu.memory_space<vmem>>, vector<32x32xf32>
    %c0_7 = arith.constant 0 : index
    %c0_8 = arith.constant 0 : index
    %8 = vector.load %arg5[%c0_7, %c0_8] : memref<1x32xf32, #tpu.memory_space<vmem>>, vector<1x32xf32>
    %cst_9 = arith.constant dense<0.000000e+00> : vector<8x32xf32>
    %9 = tpu.matmul %6, %7, %cst_9 {dimension_numbers = #tpu.dot_dimension_numbers<[1], [0], [0], [1], [0, 0, 1, 1], [], []>} : vector<8x32xf32>, vector<32x32xf32>, vector<8x32xf32> -> vector<8x32xf32>
    %10 = vector.broadcast %8 : vector<1x32xf32> to vector<8x32xf32>
    %11 = arith.addf %9, %10 : vector<8x32xf32>
    %12 = math.tanh %11 : vector<8x32xf32>
    %c0_10 = arith.constant 0 : index
    %c0_11 = arith.constant 0 : index
    %13 = vector.load %arg6[%c0_10, %c0_11] : memref<32x3xf32, #tpu.memory_space<vmem>>, vector<32x3xf32>
    %c0_12 = arith.constant 0 : index
    %c0_13 = arith.constant 0 : index
    %14 = vector.load %arg7[%c0_12, %c0_13] : memref<1x3xf32, #tpu.memory_space<vmem>>, vector<1x3xf32>
    %cst_14 = arith.constant dense<0.000000e+00> : vector<8x3xf32>
    %15 = tpu.matmul %12, %13, %cst_14 {dimension_numbers = #tpu.dot_dimension_numbers<[1], [0], [0], [1], [0, 0, 1, 1], [], []>} : vector<8x32xf32>, vector<32x3xf32>, vector<8x3xf32> -> vector<8x3xf32>
    %16 = vector.broadcast %14 : vector<1x3xf32> to vector<8x3xf32>
    %17 = arith.addf %15, %16 : vector<8x3xf32>
    %c0_15 = arith.constant 0 : index
    %c0_16 = arith.constant 0 : index
    %18 = vector.load %arg8[%c0_15, %c0_16] : memref<8x3xf32, #tpu.memory_space<vmem>>, vector<8x3xf32>
    tpu.vector_store %arg8[%c0_15, %c0_16], %17 {strides = array<i32>} : memref<8x3xf32, #tpu.memory_space<vmem>>, vector<8x3xf32>,
    return
  }
  func.func @transform_0(%arg0: i32) -> (i32, i32) {
    %c0_i32 = arith.constant 0 : i32
    %c0_i32_0 = arith.constant 0 : i32
    return %arg0, %c0_i32 : i32, i32
  }
  func.func @transform_1(%arg0: i32) -> (i32, i32) {
    %c0_i32 = arith.constant 0 : i32
    %c0_i32_0 = arith.constant 0 : i32
    %c0_i32_1 = arith.constant 0 : i32
    return %c0_i32, %c0_i32_0 : i32, i32
  }
  func.func @transform_2(%arg0: i32) -> (i32, i32) {
    %c0_i32 = arith.constant 0 : i32
    %c0_i32_0 = arith.constant 0 : i32
    %c0_i32_1 = arith.constant 0 : i32
    return %c0_i32, %c0_i32_0 : i32, i32
  }
  func.func @transform_3(%arg0: i32) -> (i32, i32) {
    %c0_i32 = arith.constant 0 : i32
    %c0_i32_0 = arith.constant 0 : i32
    %c0_i32_1 = arith.constant 0 : i32
    return %c0_i32, %c0_i32_0 : i32, i32
  }
  func.func @transform_4(%arg0: i32) -> (i32, i32) {
    %c0_i32 = arith.constant 0 : i32
    %c0_i32_0 = arith.constant 0 : i32
    %c0_i32_1 = arith.constant 0 : i32
    return %c0_i32, %c0_i32_0 : i32, i32
  }
  func.func @transform_5(%arg0: i32) -> (i32, i32) {
    %c0_i32 = arith.constant 0 : i32
    %c0_i32_0 = arith.constant 0 : i32
    %c0_i32_1 = arith.constant 0 : i32
    return %c0_i32, %c0_i32_0 : i32, i32
  }
  func.func @transform_6(%arg0: i32) -> (i32, i32) {
    %c0_i32 = arith.constant 0 : i32
    %c0_i32_0 = arith.constant 0 : i32
    %c0_i32_1 = arith.constant 0 : i32
    return %c0_i32, %c0_i32_0 : i32, i32
  }
  func.func @transform_7(%arg0: i32) -> (i32, i32) {
    %c0_i32 = arith.constant 0 : i32
    %c0_i32_0 = arith.constant 0 : i32
    return %arg0, %c0_i32 : i32, i32
  }
}

</mosaic_0001>

<llo_original>
// kernel: tpu_custom_call.1
$region0: #{tpu_custom_call.1}
  #allocation0 [shape = 'u32[]', space=smem, size = 0x4, offset = 0x4, fixed_abs, tag = 'smem constant byte address 0x4 - core index']
  #allocation1 [shape = 'u32[72,128]{1,0:T(1,128)}', space=vmem, size = 0x9000, scoped, tag = 'internal scratch']
  %s0 = inlined_call_operand.vmem [shape: f32[8,4], index: 0, kind: input, shape index: {}]
  %s1 = inlined_call_operand.vmem [shape: f32[4,32], index: 1, kind: input, shape index: {}]
  %s2 = inlined_call_operand.vmem [shape: f32[1,32], index: 2, kind: input, shape index: {}]
  %s3 = inlined_call_operand.vmem [shape: f32[32,32], index: 3, kind: input, shape index: {}]
  %s4 = inlined_call_operand.vmem [shape: f32[1,32], index: 4, kind: input, shape index: {}]
  %s5 = inlined_call_operand.vmem [shape: f32[32,3], index: 5, kind: input, shape index: {}]
  %s6 = inlined_call_operand.vmem [shape: f32[1,3], index: 6, kind: input, shape index: {}]
  %s7 = inlined_call_operand.vmem [shape: f32[8,3], index: 7, kind: output, shape index: {}]
  %s8 = sld [smem:[#allocation0]]
  $region38: #{tpu_custom_call.1} parent=0
    _
  %s10 = ssub.s32 1, %s8
  %s11 = scalar_select 0, %s10, %s8
  // Predicated region
  $region2: #{tpu_custom_call.1} parent=0 // pred_check
    _
  $region3: #{tpu_custom_call.1} parent=0 // pred_check_branch
    %13 = sbr.rel (0) target = $region5
  $region4: #{tpu_custom_call.1} parent=0 // pred_region
    _
  $region5: #{tpu_custom_call.1} parent=0 // pred_fallthru
    _
  // Predicated region
  $region6: #{tpu_custom_call.1} parent=0 // pred_check
    _
  $region7: #{tpu_custom_call.1} parent=0 // pred_check_branch
    %15 = sbr.rel (0) target = $region9
  $region8: #{tpu_custom_call.1} parent=0 // pred_region
    _
  $region9: #{tpu_custom_call.1} parent=0 // pred_fallthru
    _
  // Predicated region
  $region10: #{tpu_custom_call.1} parent=0 // pred_check
    _
  $region11: #{tpu_custom_call.1} parent=0 // pred_check_branch
    %17 = sbr.rel (0) target = $region13
  $region12: #{tpu_custom_call.1} parent=0 // pred_region
    _
  $region13: #{tpu_custom_call.1} parent=0 // pred_fallthru
    _
  // Predicated region
  $region14: #{tpu_custom_call.1} parent=0 // pred_check
    _
  $region15: #{tpu_custom_call.1} parent=0 // pred_check_branch
    %19 = sbr.rel (0) target = $region17
  $region16: #{tpu_custom_call.1} parent=0 // pred_region
    _
  $region17: #{tpu_custom_call.1} parent=0 // pred_fallthru
    _
  // Predicated region
  $region18: #{tpu_custom_call.1} parent=0 // pred_check
    _
  $region19: #{tpu_custom_call.1} parent=0 // pred_check_branch
    %21 = sbr.rel (0) target = $region21
  $region20: #{tpu_custom_call.1} parent=0 // pred_region
    _
  $region21: #{tpu_custom_call.1} parent=0 // pred_fallthru
    _
  // Predicated region
  $region22: #{tpu_custom_call.1} parent=0 // pred_check
    _
  $region23: #{tpu_custom_call.1} parent=0 // pred_check_branch
    %23 = sbr.rel (0) target = $region25
  $region24: #{tpu_custom_call.1} parent=0 // pred_region
    _
  $region25: #{tpu_custom_call.1} parent=0 // pred_fallthru
    _
  // Predicated region
  $region26: #{tpu_custom_call.1} parent=0 // pred_check
    _
  $region27: #{tpu_custom_call.1} parent=0 // pred_check_branch
    %25 = sbr.rel (0) target = $region29
  $region28: #{tpu_custom_call.1} parent=0 // pred_region
    _
  $region29: #{tpu_custom_call.1} parent=0 // pred_fallthru
    _
  %v26 = vld [vmem:[%s0] sm:$0xff]
  %v27 = vld [vmem:[%s1] sm:$0xf]
  %v28 = vld [vmem:[%s2] sm:$0x1]
  %v30 = vperm.slane %v28, 0
  %vm32 = vcmask 31744
  %v34 = vsel %vm32, %v26, 0
  %vm36 = vcmask 1043456
  %v38 = vsel %vm36, %v27, 0
  %40 = vmatpush.msra.mxu0 0.0
  %41 = vmatpush.msra.mxu0 0.0
  %42 = vmatpush.msra.mxu0 0.0
  %43 = vmatpush.msra.mxu0 0.0
  %44 = vmatpush.msra.mxu0 0.0
  %45 = vmatpush.msra.mxu0 0.0
  %46 = vmatpush.msra.mxu0 0.0
  %47 = vmatpush.msra.mxu0 0.0
  %48 = vmatpush.msra.mxu0 0.0
  %49 = vmatpush.msra.mxu0 0.0
  %50 = vmatpush.msra.mxu0 0.0
  %51 = vmatpush.msra.mxu0 0.0
  %52 = vmatpush.msra.mxu0 0.0
  %53 = vmatpush.msra.mxu0 0.0
  %54 = vmatpush.msra.mxu0 0.0
  %55 = vmatpush.msra.mxu0 %v38
  %56 = vmatmul.f32.gmra.mxu0 %v34
  %v57 = vpop.f32.mrf.mxu0
  %v58 = vadd.f32 %v30, %v57
  %59 = vdwg.mxu0
  %v60 = vtanh.pop %v58
  %v61 = vld [vmem:[%s3] sm:$0xff]
  %v62 = vld [vmem:[%s3 + $0x8] sm:$0xff]
  %v63 = vld [vmem:[%s3 + $0x10] sm:$0xff]
  %v64 = vld [vmem:[%s3 + $0x18] sm:$0xff]
  %v65 = vld [vmem:[%s4] sm:$0x1]
  %v67 = vperm.slane %v65, 0
  %vm69 = vcmask 261120
  %v71 = vsel %vm69, %v60, 0
  %73 = vmatpush.msra.mxu0 0.0
  %74 = vmatpush.msra.mxu0 0.0
  %75 = vmatpush.msra.mxu0 0.0
  %76 = vmatpush.msra.mxu0 0.0
  %77 = vmatpush.msra.mxu0 0.0
  %78 = vmatpush.msra.mxu0 0.0
  %79 = vmatpush.msra.mxu0 0.0
  %80 = vmatpush.msra.mxu0 0.0
  %81 = vmatpush.msra.mxu0 0.0
  %82 = vmatpush.msra.mxu0 0.0
  %83 = vmatpush.msra.mxu0 0.0
  %84 = vmatpush.msra.mxu0 0.0
  %85 = vmatpush.msra.mxu0 %v64
  %86 = vmatpush.msra.mxu0 %v63
  %87 = vmatpush.msra.mxu0 %v62
  %88 = vmatpush.msra.mxu0 %v61
  %89 = vmatmul.f32.gmra.mxu0 %v71
  %v90 = vpop.f32.mrf.mxu0
  %v91 = vadd.f32 %v67, %v90
  %92 = vdwg.mxu0
  %v93 = vtanh.pop %v91
  %v94 = vld [vmem:[%s5] sm:$0xff]
  %v95 = vld [vmem:[%s5 + $0x8] sm:$0xff]
  %v96 = vld [vmem:[%s5 + $0x10] sm:$0xff]
  %v97 = vld [vmem:[%s5 + $0x18] sm:$0xff]
  %v98 = vld [vmem:[%s6] sm:$0x1]
  %v100 = vperm.slane %v98, 0
  %v103 = vsel %vm69, %v93, 0
  %105 = vmatpush.msra.mxu0 0.0
  %106 = vmatpush.msra.mxu0 0.0
  %107 = vmatpush.msra.mxu0 0.0
  %108 = vmatpush.msra.mxu0 0.0
  %109 = vmatpush.msra.mxu0 0.0
  %110 = vmatpush.msra.mxu0 0.0
  %111 = vmatpush.msra.mxu0 0.0
  %112 = vmatpush.msra.mxu0 0.0
  %113 = vmatpush.msra.mxu0 0.0
  %114 = vmatpush.msra.mxu0 0.0
  %115 = vmatpush.msra.mxu0 0.0
  %116 = vmatpush.msra.mxu0 0.0
  %117 = vmatpush.msra.mxu0 %v97
  %118 = vmatpush.msra.mxu0 %v96
  %119 = vmatpush.msra.mxu0 %v95
  %120 = vmatpush.msra.mxu0 %v94
  %121 = vmatmul.f32.gmra.mxu0 %v103
  %v122 = vpop.f32.mrf.mxu0
  %v123 = vadd.f32 %v100, %v122
  %124 = vdwg.mxu0
  %vm125 = vcmask 23552
  %126 = vst.msk [vmem:[%s7] sm:$0xff] %vm125, %v123
  // Predicated region
  $region30: #{tpu_custom_call.1} parent=0 // pred_check
    _
  $region31: #{tpu_custom_call.1} parent=0 // pred_check_branch
    %128 = sbr.rel (0) target = $region33
  $region32: #{tpu_custom_call.1} parent=0 // pred_region
    _
  $region33: #{tpu_custom_call.1} parent=0 // pred_fallthru
    _
  // Predicated region
  $region34: #{tpu_custom_call.1} parent=0 // pred_check
    _
  $region35: #{tpu_custom_call.1} parent=0 // pred_check_branch
    %130 = sbr.rel (0) target = $region37
  $region36: #{tpu_custom_call.1} parent=0 // pred_region
    _
  $region37: #{tpu_custom_call.1} parent=0 // pred_fallthru
    _

</llo_original>
